<compile_context>
chip_gen: v6e
topology: v6e:2x2x1
jax: 0.10.0
libtpu: 0.0.40
codegen_flags: <defaults>
</compile_context>

<pallas_src>
import jax
import jax.numpy as jnp
from jax.experimental import pallas as pl
from jax.experimental.pallas import tpu as pltpu

EPS = 1e-5            # nn.BatchNorm2d default eps
LEAKY_SLOPE = 0.2     # nn.LeakyReLU(0.2)
KW = 4                # kernel_size in the module
PADW = 1              # padding in the module

VMEM_LIMIT = 48 * 1024 * 1024        # explicit scoped-VMEM limit (fits v7x)
TILE_VMEM_BUDGET = 24 * 1024 * 1024  # budget for lane-proportional buffers


# --------------------------------------------------------------------------
# Kernels
# --------------------------------------------------------------------------
def _make_conv_act_kernel(act):
    """Fused matmul + bias + activation (layers without BatchNorm)."""
    def kernel(p_ref, w_ref, b_ref, conv_ref, out_ref):
        # (ct, CK) bf16 @ (CK, nt) bf16 -> f32 MXU accumulator.
        acc = jnp.dot(w_ref[...], p_ref[...],
                      preferred_element_type=jnp.float32)
        acc = acc + b_ref[...]                        # (ct, 1) broadcast
        conv_ref[...] = acc.astype(conv_ref.dtype)    # forward-hook intermediate
        if act == "leaky":
            acc = jnp.maximum(acc, LEAKY_SLOPE * acc)
        elif act == "sigmoid":
            acc = jax.nn.sigmoid(acc)
        out_ref[...] = acc.astype(out_ref.dtype)
    return kernel


def _conv_stats_kernel(p_ref, w_ref, conv_ref, s1_ref, s2_ref):
    """Matmul (no bias: BN layers use bias=False) + per-channel sum / sumsq
    accumulated across the N ("arbitrary") grid axis."""
    n = pl.program_id(1)
    acc = jnp.dot(w_ref[...], p_ref[...],
                  preferred_element_type=jnp.float32)
    conv_ref[...] = acc.astype(conv_ref.dtype)

    @pl.when(n == 0)
    def _():
        s1_ref[...] = jnp.zeros_like(s1_ref)
        s2_ref[...] = jnp.zeros_like(s2_ref)

    s1_ref[...] += jnp.sum(acc, axis=1, keepdims=True)
    s2_ref[...] += jnp.sum(acc * acc, axis=1, keepdims=True)


def _make_norm_act_kernel(n_total):
    """BatchNorm2d (training-mode batch stats) folded to scale/shift + LeakyReLU."""
    inv_n = 1.0 / float(n_total)

    def kernel(conv_ref, s1_ref, s2_ref, g_ref, beta_ref, out_ref):
        mean = s1_ref[...] * inv_n
        var = jnp.maximum(s2_ref[...] * inv_n - mean * mean, 0.0)  # clamp
        scale = jax.lax.rsqrt(var + EPS) * g_ref[...]
        shift = beta_ref[...] - mean * scale
        y = conv_ref[...].astype(jnp.float32) * scale + shift
        y = jnp.maximum(y, LEAKY_SLOPE * y)
        out_ref[...] = y.astype(out_ref.dtype)

    return kernel


# --------------------------------------------------------------------------
# Tile selection
# --------------------------------------------------------------------------
def _pick_cout_tile(cout_p):
    """Largest tile in {128,...,8} dividing the padded Cout (grid extent 1 ok)."""
    for t in (128, 64, 32, 16, 8):
        if cout_p % t == 0:
            return t
    return cout_p


def _pick_n_tile(n_total, ck, ct):
    """Largest lane tile (multiple of 128, dividing N) fitting the VMEM budget.
    If N is not a multiple of 128 (toy sizes), fall back to the full extent."""
    if n_total % 128 != 0:
        return n_total
    # bytes / lane: patches (bf16, 2 bufs) + two bf16 output blocks (2 bufs each)
    per_lane = 4 * ck + 8 * ct + 8
    cap = max(128, TILE_VMEM_BUDGET // per_lane)
    t = 128
    while (t * 2 <= cap) and (t * 2 <= n_total) and (n_total % (t * 2) == 0) \
            and (t * 2 <= 4096):
        t *= 2
    return t


# --------------------------------------------------------------------------
# Per-layer wrapper: im2col glue + pallas_call(s)
# --------------------------------------------------------------------------
def conv_norm_act(x_cbhw, w, b, gamma, beta, *, stride, padding, act):
    """x_cbhw: (Cin, B, H, W); w: (Cout, Cin, K, K).
    Returns (post-activation, pre-norm conv output), both (Cout, B, Ho, Wo) bf16."""
    Cin, B, H, W = x_cbhw.shape
    Cout, _, K, _ = w.shape
    has_norm = gamma is not None

    Ho = (H + 2 * padding - K) // stride + 1
    Wo = (W + 2 * padding - K) // stride + 1
    N = B * Ho * Wo
    CK = Cin * K * K

    # ---- im2col glue (JAX): zero pad + tap gather, lane-dense (CK, N) bf16 ----
    # TODO(synk): build patches in-kernel from a halo'd VMEM tile at prod sizes.
    xp = jnp.pad(x_cbhw, ((0, 0), (0, 0), (padding, padding), (padding, padding)))
    taps = [xp[:, :, ky:ky + stride * Ho:stride, kx:kx + stride * Wo:stride]
            for ky in range(K) for kx in range(K)]
    patches = jnp.stack(taps, axis=0).reshape(K, K, Cin, B, Ho, Wo)
    patches = jnp.transpose(patches, (2, 0, 1, 3, 4, 5)).reshape(CK, N)
    patches = patches.astype(jnp.bfloat16)

    # ---- pad Cout to a multiple of 8 so stores/tiles are never degenerate ----
    CoutP = ((Cout + 7) // 8) * 8
    pad_c = CoutP - Cout
    w2d = jnp.pad(w.reshape(Cout, CK), ((0, pad_c), (0, 0))).astype(jnp.bfloat16)

    ct = _pick_cout_tile(CoutP)
    nt = _pick_n_tile(N, CK, ct)
    grid = (CoutP // ct, N // nt)

    patches_spec = pl.BlockSpec((CK, nt), lambda i, n: (0, n))
    weight_spec = pl.BlockSpec((ct, CK), lambda i, n: (i, 0))
    chan_spec = pl.BlockSpec((ct, 1), lambda i, n: (i, 0))
    tile_spec = pl.BlockSpec((ct, nt), lambda i, n: (i, n))

    if has_norm:
        # Pass 1: conv matmul (bf16 out) + per-channel sum/sumsq accumulation.
        conv_out, s1, s2 = pl.pallas_call(
            _conv_stats_kernel,
            out_shape=(jax.ShapeDtypeStruct((CoutP, N), jnp.bfloat16),
                       jax.ShapeDtypeStruct((CoutP, 1), jnp.float32),
                       jax.ShapeDtypeStruct((CoutP, 1), jnp.float32)),
            grid=grid,
            in_specs=[patches_spec, weight_spec],
            out_specs=(tile_spec, chan_spec, chan_spec),
            compiler_params=pltpu.CompilerParams(
                dimension_semantics=("parallel", "arbitrary"),
                vmem_limit_bytes=VMEM_LIMIT),
        )(patches, w2d)

        g2d = jnp.pad(gamma.reshape(Cout, 1), ((0, pad_c), (0, 0))).astype(jnp.float32)
        beta2d = jnp.pad(beta.reshape(Cout, 1), ((0, pad_c), (0, 0))).astype(jnp.float32)

        # Pass 2: normalize + affine + LeakyReLU (fully parallel grid).
        y = pl.pallas_call(
            _make_norm_act_kernel(N),
            out_shape=jax.ShapeDtypeStruct((CoutP, N), jnp.bfloat16),
            grid=grid,
            in_specs=[tile_spec, chan_spec, chan_spec, chan_spec, chan_spec],
            out_specs=tile_spec,
            compiler_params=pltpu.CompilerParams(
                dimension_semantics=("parallel", "parallel"),
                vmem_limit_bytes=VMEM_LIMIT),
        )(conv_out, s1, s2, g2d, beta2d)
    else:
        if b is None:
            b = jnp.zeros((Cout,), jnp.float32)
        b2d = jnp.pad(b.reshape(Cout, 1), ((0, pad_c), (0, 0))).astype(jnp.float32)
        conv_out, y = pl.pallas_call(
            _make_conv_act_kernel(act),
            out_shape=(jax.ShapeDtypeStruct((CoutP, N), jnp.bfloat16),
                       jax.ShapeDtypeStruct((CoutP, N), jnp.bfloat16)),
            grid=grid,
            in_specs=[patches_spec, weight_spec, chan_spec],
            out_specs=(tile_spec, tile_spec),
            compiler_params=pltpu.CompilerParams(
                dimension_semantics=("parallel", "parallel"),
                vmem_limit_bytes=VMEM_LIMIT),
        )(patches, w2d, b2d)

    y = y[:Cout].reshape(Cout, B, Ho, Wo)
    conv_out = conv_out[:Cout].reshape(Cout, B, Ho, Wo)
    return y, conv_out


# --------------------------------------------------------------------------
# NLayerDiscriminator: parameter construction + forward
# --------------------------------------------------------------------------
def init_discriminator_params(key, input_nc, ndf=64, n_layers=3,
                              use_sigmoid=False):
    """Mirrors NLayerDiscriminator.__init__ with norm_layer=nn.BatchNorm2d
    (=> use_bias=False for the intermediate convs). Weights ~ N(0, 0.02)."""
    cfg = [(input_nc, ndf, 2, True, False, "leaky")]            # input_conv
    nf_mult = 1
    for n in range(1, n_layers):                                # intermediate
        nf_prev, nf_mult = nf_mult, min(2 ** n, 8)
        cfg.append((ndf * nf_prev, ndf * nf_mult, 2, False, True, "leaky"))
    nf_prev, nf_mult = nf_mult, min(2 ** n_layers, 8)           # stride-1 conv
    cfg.append((ndf * nf_prev, ndf * nf_mult, 1, False, True, "leaky"))
    last_act = "sigmoid" if use_sigmoid else "none"             # last_conv
    cfg.append((ndf * nf_mult, 1, 1, True, False, last_act))

    params = []
    for (cin, cout, s, use_b, use_n, act) in cfg:
        key, kw_key, kb_key = jax.random.split(key, 3)
        w = 0.02 * jax.random.normal(kw_key, (cout, cin, KW, KW), jnp.float32)
        bb = (0.01 * jax.random.normal(kb_key, (cout,), jnp.float32)
              if use_b else None)
        g = jnp.ones((cout,), jnp.float32) if use_n else None
        be = jnp.zeros((cout,), jnp.float32) if use_n else None
        params.append(dict(w=w, b=bb, gamma=g, beta=be, stride=s, act=act))
    return params


def nlayer_discriminator_forward(x, params):
    """Pallas forward. Returns (output, intermediate conv outputs) matching
    NLayerDiscriminator.forward / get_intermediate_outputs (NCHW, f32)."""
    intermediates = []
    h = jnp.transpose(x, (1, 0, 2, 3))          # (C, B, H, W) inter-layer layout
    for p in params:
        h, conv = conv_norm_act(h, p["w"], p["b"], p["gamma"], p["beta"],
                                stride=p["stride"], padding=PADW, act=p["act"])
        intermediates.append(
            jnp.transpose(conv, (1, 0, 2, 3)).astype(jnp.float32))
    out = jnp.transpose(h, (1, 0, 2, 3)).astype(jnp.float32)
    return out, intermediates


# --------------------------------------------------------------------------
# Pure-JAX reference (PyTorch semantics, f32 highest precision)
# --------------------------------------------------------------------------
def reference_forward(x, params):
    intermediates = []
    h = x
    for p in params:
        y = jax.lax.conv_general_dilated(
            h, p["w"], (p["stride"],) * 2, [(PADW, PADW), (PADW, PADW)],
            dimension_numbers=("NCHW", "OIHW", "NCHW"),
            precision=jax.lax.Precision.HIGHEST)
        if p["b"] is not None:
            y = y + p["b"][None, :, None, None]
        intermediates.append(y)
        if p["gamma"] is not None:   # BatchNorm2d, training-mode batch stats
            m = y.mean(axis=(0, 2, 3), keepdims=True)
            v = ((y - m) ** 2).mean(axis=(0, 2, 3), keepdims=True)
            y = (y - m) * jax.lax.rsqrt(v + EPS)
            y = (y * p["gamma"][None, :, None, None]
                 + p["beta"][None, :, None, None])
        if p["act"] == "leaky":
            y = jnp.where(y >= 0, y, LEAKY_SLOPE * y)
        elif p["act"] == "sigmoid":
            y = jax.nn.sigmoid(y)
        h = y
    return h, intermediates


if __name__ == "__main__":
    # Small config consistent with the module: input_nc=3, ndf=8, n_layers=3,
    # input (2, 3, 32, 32). Spatial chain: 32 -> 16 -> 8 -> 4 -> 3 -> 2.
    B, C_IN, H, W = 2, 3, 32, 32
    NDF, N_LAYERS = 8, 3

    key = jax.random.PRNGKey(0)
    kx, kp = jax.random.split(key)
    x = jax.random.normal(kx, (B, C_IN, H, W), dtype=jnp.float32)
    params = init_discriminator_params(kp, C_IN, ndf=NDF, n_layers=N_LAYERS)

    out, inter = nlayer_discriminator_forward(x, params)
    out = jax.block_until_ready(out)

    ref, ref_inter = reference_forward(x, params)
    assert out.shape == ref.shape == (B, 1, 2, 2), (out.shape, ref.shape)
    max_err = float(jnp.max(jnp.abs(out - ref)))
    assert jnp.allclose(out, ref, atol=5e-2, rtol=5e-2), max_err
    for a, r in zip(inter, ref_inter):   # forward-hook intermediates
        assert a.shape == r.shape, (a.shape, r.shape)

    print("KERNEL_OK")
</pallas_src>

<mosaic_0001>
module attributes {stable_mosaic.version = 11 : i64} {
  func.func @kernel(%arg0: i32, %arg1: i32, %arg2: memref<48x512xbf16, #tpu.memory_space<vmem>>, %arg3: memref<8x48xbf16, #tpu.memory_space<vmem>>, %arg4: memref<8x1xf32, #tpu.memory_space<vmem>>, %arg5: memref<8x512xbf16, #tpu.memory_space<vmem>>, %arg6: memref<8x512xbf16, #tpu.memory_space<vmem>>) attributes {dimension_semantics = [#tpu.dimension_semantics<parallel>, #tpu.dimension_semantics<parallel>], iteration_bounds = array<i64: 1, 1>, scalar_prefetch = 0 : i64, scratch_operands = 0 : i64, tpu.core_type = #tpu.core_type<tc>, window_params = [{transform_indices = @transform_0, window_bounds = array<i64: 48, 512>}, {transform_indices = @transform_1, window_bounds = array<i64: 8, 48>}, {transform_indices = @transform_2, window_bounds = array<i64: 8, 1>}, {transform_indices = @transform_3, window_bounds = array<i64: 8, 512>}, {transform_indices = @transform_4, window_bounds = array<i64: 8, 512>}]} {
    %c0 = arith.constant 0 : index
    %c0_0 = arith.constant 0 : index
    %0 = vector.load %arg3[%c0, %c0_0] : memref<8x48xbf16, #tpu.memory_space<vmem>>, vector<8x48xbf16>
    %c0_1 = arith.constant 0 : index
    %c0_2 = arith.constant 0 : index
    %1 = vector.load %arg2[%c0_1, %c0_2] : memref<48x512xbf16, #tpu.memory_space<vmem>>, vector<48x512xbf16>
    %cst = arith.constant dense<0.000000e+00> : vector<8x512xf32>
    %2 = tpu.matmul %0, %1, %cst {dimension_numbers = #tpu.dot_dimension_numbers<[1], [0], [0], [1], [0, 0, 1, 1], [], []>} : vector<8x48xbf16>, vector<48x512xbf16>, vector<8x512xf32> -> vector<8x512xf32>
    %c0_3 = arith.constant 0 : index
    %c0_4 = arith.constant 0 : index
    %3 = vector.load %arg4[%c0_3, %c0_4] : memref<8x1xf32, #tpu.memory_space<vmem>>, vector<8x1xf32>
    %4 = vector.broadcast %3 : vector<8x1xf32> to vector<8x512xf32>
    %5 = arith.addf %2, %4 : vector<8x512xf32>
    %6 = arith.truncf %5 : vector<8x512xf32> to vector<8x512xbf16>
    %c0_5 = arith.constant 0 : index
    %c0_6 = arith.constant 0 : index
    %7 = vector.load %arg5[%c0_5, %c0_6] : memref<8x512xbf16, #tpu.memory_space<vmem>>, vector<8x512xbf16>
    tpu.vector_store %arg5[%c0_5, %c0_6], %6 {strides = array<i32>} : memref<8x512xbf16, #tpu.memory_space<vmem>>, vector<8x512xbf16>,
    %cst_7 = arith.constant 2.000000e-01 : f32
    %8 = vector.broadcast %cst_7 : f32 to vector<8x512xf32>
    %9 = arith.mulf %8, %5 : vector<8x512xf32>
    %10 = arith.maximumf %5, %9 : vector<8x512xf32>
    %11 = arith.truncf %10 : vector<8x512xf32> to vector<8x512xbf16>
    %c0_8 = arith.constant 0 : index
    %c0_9 = arith.constant 0 : index
    %12 = vector.load %arg6[%c0_8, %c0_9] : memref<8x512xbf16, #tpu.memory_space<vmem>>, vector<8x512xbf16>
    tpu.vector_store %arg6[%c0_8, %c0_9], %11 {strides = array<i32>} : memref<8x512xbf16, #tpu.memory_space<vmem>>, vector<8x512xbf16>,
    return
  }
  func.func @transform_0(%arg0: i32, %arg1: i32) -> (i32, i32) {
    %c0_i32 = arith.constant 0 : i32
    %c0_i32_0 = arith.constant 0 : i32
    return %c0_i32, %arg1 : i32, i32
  }
  func.func @transform_1(%arg0: i32, %arg1: i32) -> (i32, i32) {
    %c0_i32 = arith.constant 0 : i32
    %c0_i32_0 = arith.constant 0 : i32
    return %arg0, %c0_i32 : i32, i32
  }
  func.func @transform_2(%arg0: i32, %arg1: i32) -> (i32, i32) {
    %c0_i32 = arith.constant 0 : i32
    %c0_i32_0 = arith.constant 0 : i32
    return %arg0, %c0_i32 : i32, i32
  }
  func.func @transform_3(%arg0: i32, %arg1: i32) -> (i32, i32) {
    %c0_i32 = arith.constant 0 : i32
    return %arg0, %arg1 : i32, i32
  }
  func.func @transform_4(%arg0: i32, %arg1: i32) -> (i32, i32) {
    %c0_i32 = arith.constant 0 : i32
    return %arg0, %arg1 : i32, i32
  }
}

</mosaic_0001>

<llo_original>
// kernel: tpu_custom_call.1
$region0: #{tpu_custom_call.1}
  #allocation0 [shape = 'u32[]', space=smem, size = 0x4, offset = 0x4, fixed_abs, tag = 'smem constant byte address 0x4 - core index']
  #allocation1 [shape = 'u32[144,128]{1,0:T(1,128)}', space=vmem, size = 0x12000, scoped, tag = 'internal scratch']
  %s0 = inlined_call_operand.hbm [shape: bf16[48,512], index: 0, kind: input, shape index: {}]
  %s1 = inlined_call_operand.vmem [shape: bf16[8,48], index: 1, kind: input, shape index: {}]
  %s2 = inlined_call_operand.vmem [shape: f32[8,1], index: 2, kind: input, shape index: {}]
  %s3 = inlined_call_operand.hbm [shape: bf16[8,512], index: 3, kind: output, shape index: {0}]
  %s4 = inlined_call_operand.hbm [shape: bf16[8,512], index: 4, kind: output, shape index: {1}]
  %5 = xla_tuple %s3, %s4
  %s6 = sld [smem:[#allocation0]]
  $region34: #{tpu_custom_call.1} parent=0
    _
  %s8 = ssub.s32 1, %s6
  %s9 = scalar_select 0, %s8, %s6
  $region1: #{tpu_custom_call.1} parent=0
    #allocation2 [shape = 'u8[49152]{0}', space=vmem, size = 0xc000, scoped, tag = 'input window, operand 0, single buffered']
    #allocation3 [shape = 's32[1]{0}', space=sflag, size = 0x4, scoped, tag = 'scoped memory for tpu_custom_call.1']
    #allocation4 [shape = 's32[1]{0}', space=sflag, size = 0x4, scoped, tag = 'scoped memory for tpu_custom_call.1']
    #allocation5 [shape = 'u8[8192]{0}', space=vmem, size = 0x2000, scoped, tag = 'output window, operand 0, single buffered']
    #allocation6 [shape = 'u8[8192]{0}', space=vmem, size = 0x2000, scoped, tag = 'output window, operand 1, single buffered']
    #allocation7 [shape = 's32[1]{0}', space=sflag, size = 0x4, scoped, tag = 'scoped memory for tpu_custom_call.1']
    %10 = vsyncpa [#allocation3], 0
    %11 = vsyncpa [#allocation4], 0
    %12 = vsyncpa [#allocation7], 0
    // Predicated region
    $region2: #{tpu_custom_call.1} parent=1 // pred_check
      _
    $region3: #{tpu_custom_call.1} parent=1 // pred_check_branch
      %14 = sbr.rel (0) target = $region5
    $region4: #{tpu_custom_call.1} parent=1 // pred_region
      %s16 = ssub.s32 1536, 1536
      %17 = vsyncadd [#allocation3], %s16
      %s18 = sshll.u32 [#allocation2], 4
      %s19 = int_to_ptr.vmem [resolvable:$true] %s18
      %24 = dma.hbm_to_vmem [thread:$0]  %s0, 1536, %s19, [#allocation3], 256, 256, 16
    $region5: #{tpu_custom_call.1} parent=1 // pred_fallthru
      _
    // Predicated region
    $region6: #{tpu_custom_call.1} parent=1 // pred_check
      _
    $region7: #{tpu_custom_call.1} parent=1 // pred_check_branch
      %26 = sbr.rel (0) target = $region9
    $region8: #{tpu_custom_call.1} parent=1 // pred_region
      _
    $region9: #{tpu_custom_call.1} parent=1 // pred_fallthru
      _
    // Predicated region
    $region10: #{tpu_custom_call.1} parent=1 // pred_check
      _
    $region11: #{tpu_custom_call.1} parent=1 // pred_check_branch
      %28 = sbr.rel (0) target = $region13
    $region12: #{tpu_custom_call.1} parent=1 // pred_region
      _
    $region13: #{tpu_custom_call.1} parent=1 // pred_fallthru
      _
    // Predicated region
    $region14: #{tpu_custom_call.1} parent=1 // pred_check
      _
    $region15: #{tpu_custom_call.1} parent=1 // pred_check_branch
      %30 = sbr.rel (0) target = $region17
    $region16: #{tpu_custom_call.1} parent=1 // pred_region
      %31 = dma.done [#allocation3], 1536
    $region17: #{tpu_custom_call.1} parent=1 // pred_fallthru
      _
    %v33 = vld [vmem:[%s1] sm:$0xf]
    %v34 = vld [vmem:[#allocation2] sm:$0xff]
    %v35 = vld [vmem:[#allocation2 + $0x8] sm:$0xff]
    %v36 = vld [vmem:[#allocation2 + $0x10] sm:$0xff]
    %v37 = vld [vmem:[#allocation2 + $0x18] sm:$0xff]
    %v38 = vld [vmem:[#allocation2 + $0x20] sm:$0xff]
    %v39 = vld [vmem:[#allocation2 + $0x28] sm:$0xff]
    %v40 = vld [vmem:[#allocation2 + $0x30] sm:$0xff]
    %v41 = vld [vmem:[#allocation2 + $0x38] sm:$0xff]
    %v42 = vld [vmem:[#allocation2 + $0x40] sm:$0xff]
    %v43 = vld [vmem:[#allocation2 + $0x48] sm:$0xff]
    %v44 = vld [vmem:[#allocation2 + $0x50] sm:$0xff]
    %v45 = vld [vmem:[#allocation2 + $0x58] sm:$0xff]
    %v46 = vld [vmem:[%s2] sm:$0xff]
    %48 = vset.pattern.permute.xlu0 0
    %49 = vperm.xlu0 %48, %v46
    %v50 = vpop.permute.xlu0 %49
    %v64 = vunpack.c.l.b16 %v34
    %v65 = vunpack.c.h.b16 %v34
    %v66 = vunpack.c.l.b16 %v35
    %v67 = vunpack.c.h.b16 %v35
    %v68 = vunpack.c.l.b16 %v36
    %v69 = vunpack.c.h.b16 %v36
    %v70 = vunpack.c.l.b16 %v37
    %v71 = vunpack.c.h.b16 %v37
    %v72 = vunpack.c.l.b16 %v38
    %v73 = vunpack.c.h.b16 %v38
    %v74 = vunpack.c.l.b16 %v39
    %v75 = vunpack.c.h.b16 %v39
    %v76 = vunpack.c.l.b16 %v40
    %v77 = vunpack.c.h.b16 %v40
    %v78 = vunpack.c.l.b16 %v41
    %v79 = vunpack.c.h.b16 %v41
    %v80 = vunpack.c.l.b16 %v42
    %v81 = vunpack.c.h.b16 %v42
    %v82 = vunpack.c.l.b16 %v43
    %v83 = vunpack.c.h.b16 %v43
    %v84 = vunpack.c.l.b16 %v44
    %v85 = vunpack.c.h.b16 %v44
    %v86 = vunpack.c.l.b16 %v45
    %v87 = vunpack.c.h.b16 %v45
    %v88 = vpack.c.b16 %v68, %v64
    %v89 = vpack.c.b16 %v69, %v65
    %v90 = vpack.c.b16 %v70, %v66
    %v91 = vpack.c.b16 %v71, %v67
    %v92 = vpack.c.b16 %v76, %v72
    %v93 = vpack.c.b16 %v77, %v73
    %v94 = vpack.c.b16 %v78, %v74
    %v95 = vpack.c.b16 %v79, %v75
    %v96 = vpack.c.b16 %v84, %v80
    %v97 = vpack.c.b16 %v85, %v81
    %v98 = vpack.c.b16 %v86, %v82
    %v99 = vpack.c.b16 %v87, %v83
    %vm112 = vcmask 392192
    %v114 = vsel %vm112, %v33, 0
    %116 = vmatprep.subr.bf16.mxu0 0
    %117 = vmatpush1.bf16.msra.mxu0 0
    %118 = vmatprep.subr.bf16.mxu0 0
    %119 = vmatpush1.bf16.msra.mxu0 0
    %120 = vmatprep.subr.bf16.mxu0 0
    %121 = vmatpush1.bf16.msra.mxu0 0
    %122 = vmatprep.subr.bf16.mxu0 0
    %123 = vmatpush1.bf16.msra.mxu0 0
    %124 = vmatprep.subr.bf16.mxu0 0
    %125 = vmatpush1.bf16.msra.mxu0 0
    %126 = vmatprep.subr.bf16.mxu0 %v97
    %127 = vmatpush1.bf16.msra.mxu0 %v96
    %128 = vmatprep.subr.bf16.mxu0 %v93
    %129 = vmatpush1.bf16.msra.mxu0 %v92
    %130 = vmatprep.subr.bf16.mxu0 %v89
    %131 = vmatpush1.bf16.msra.mxu0 %v88
    %132 = vmatprep.subr.bf16.mxu0 0
    %133 = vmatpush2.bf16.msra.mxu0 0
    %134 = vmatprep.subr.bf16.mxu0 0
    %135 = vmatpush2.bf16.msra.mxu0 0
    %136 = vmatprep.subr.bf16.mxu0 0
    %137 = vmatpush2.bf16.msra.mxu0 0
    %138 = vmatprep.subr.bf16.mxu0 0
    %139 = vmatpush2.bf16.msra.mxu0 0
    %140 = vmatprep.subr.bf16.mxu0 0
    %141 = vmatpush2.bf16.msra.mxu0 0
    %142 = vmatprep.subr.bf16.mxu0 0
    %143 = vmatpush2.bf16.msra.mxu0 0
    %144 = vmatprep.subr.bf16.mxu0 0
    %145 = vmatpush2.bf16.msra.mxu0 0
    %146 = vmatprep.subr.bf16.mxu0 0
    %147 = vmatpush2.bf16.msra.mxu0 0
    %148 = vmatprep.mubr.bf16.mxu0 0
    %149 = vmatmul.mubr.bf16.gmra.mxu0 %v114
    %v150 = vpop.f32.mrf.mxu0
    %v151 = vadd.f32 %v50, %v150
    %v152 = vpop.f32.mrf.mxu0
    %v153 = vadd.f32 %v50, %v152
    %v154 = vpop.f32.mrf.mxu0
    %v155 = vpop.f32.mrf.mxu0
    %156 = vdwg.mxu0
    %157 = vmatprep.subr.bf16.mxu0 0
    %158 = vmatpush1.bf16.msra.mxu0 0
    %159 = vmatprep.subr.bf16.mxu0 0
    %160 = vmatpush1.bf16.msra.mxu0 0
    %161 = vmatprep.subr.bf16.mxu0 0
    %162 = vmatpush1.bf16.msra.mxu0 0
    %163 = vmatprep.subr.bf16.mxu0 0
    %164 = vmatpush1.bf16.msra.mxu0 0
    %165 = vmatprep.subr.bf16.mxu0 0
    %166 = vmatpush1.bf16.msra.mxu0 0
    %167 = vmatprep.subr.bf16.mxu0 %v99
    %168 = vmatpush1.bf16.msra.mxu0 %v98
    %169 = vmatprep.subr.bf16.mxu0 %v95
    %170 = vmatpush1.bf16.msra.mxu0 %v94
    %171 = vmatprep.subr.bf16.mxu0 %v91
    %172 = vmatpush1.bf16.msra.mxu0 %v90
    %173 = vmatprep.subr.bf16.mxu0 0
    %174 = vmatpush2.bf16.msra.mxu0 0
    %175 = vmatprep.subr.bf16.mxu0 0
    %176 = vmatpush2.bf16.msra.mxu0 0
    %177 = vmatprep.subr.bf16.mxu0 0
    %178 = vmatpush2.bf16.msra.mxu0 0
    %179 = vmatprep.subr.bf16.mxu0 0
    %180 = vmatpush2.bf16.msra.mxu0 0
    %181 = vmatprep.subr.bf16.mxu0 0
    %182 = vmatpush2.bf16.msra.mxu0 0
    %183 = vmatprep.subr.bf16.mxu0 0
    %184 = vmatpush2.bf16.msra.mxu0 0
    %185 = vmatprep.subr.bf16.mxu0 0
    %186 = vmatpush2.bf16.msra.mxu0 0
    %187 = vmatprep.subr.bf16.mxu0 0
    %188 = vmatpush2.bf16.msra.mxu0 0
    %189 = vmatprep.mubr.bf16.mxu0 0
    %190 = vmatmul.mubr.bf16.gmra.mxu0 %v114
    %v191 = vpop.f32.mrf.mxu0
    %v192 = vadd.f32 %v50, %v191
    %v193 = vpop.f32.mrf.mxu0
    %v194 = vadd.f32 %v50, %v193
    %v195 = vpop.f32.mrf.mxu0
    %v196 = vpop.f32.mrf.mxu0
    %197 = vdwg.mxu0
    %v198 = vpack.c.bf16 %v151, %v151
    %v199 = vpack.c.bf16 %v153, %v153
    %v200 = vpack.c.bf16 %v192, %v192
    %v201 = vpack.c.bf16 %v194, %v194
    %v206 = vunpack.c.l.b16 %v198
    %v207 = vunpack.c.l.b16 %v199
    %v208 = vunpack.c.l.b16 %v200
    %v209 = vunpack.c.l.b16 %v201
    %v210 = vpack.c.b16 %v207, %v206
    %v211 = vpack.c.b16 %v209, %v208
    %214 = vst [vmem:[#allocation5] sm:$0xff] %v210
    %215 = vst [vmem:[#allocation5 + $0x8] sm:$0xff] %v211
    %v216 = vmul.f32 %v151, 0.2
    %v217 = vmul.f32 %v153, 0.2
    %v218 = vmul.f32 %v192, 0.2
    %v219 = vmul.f32 %v194, 0.2
    %v220 = vmax.f32 %v151, %v216
    %v221 = vmax.f32 %v153, %v217
    %v222 = vmax.f32 %v192, %v218
    %v223 = vmax.f32 %v194, %v219
    %v224 = vpack.c.bf16 %v220, %v220
    %v225 = vpack.c.bf16 %v221, %v221
    %v226 = vpack.c.bf16 %v222, %v222
    %v227 = vpack.c.bf16 %v223, %v223
    %v232 = vunpack.c.l.b16 %v224
    %v233 = vunpack.c.l.b16 %v225
    %v234 = vunpack.c.l.b16 %v226
    %v235 = vunpack.c.l.b16 %v227
    %v236 = vpack.c.b16 %v233, %v232
    %v237 = vpack.c.b16 %v235, %v234
    %240 = vst [vmem:[#allocation6] sm:$0xff] %v236
    %241 = vst [vmem:[#allocation6 + $0x8] sm:$0xff] %v237
    // Predicated region
    $region18: #{tpu_custom_call.1} parent=1 // pred_check
      _
    $region19: #{tpu_custom_call.1} parent=1 // pred_check_branch
      %243 = sbr.rel (0) target = $region21
    $region20: #{tpu_custom_call.1} parent=1 // pred_region
      %s245 = ssub.s32 256, 256
      %246 = vsyncadd [#allocation4], %s245
      %s248 = sshll.u32 [#allocation5], 4
      %s249 = int_to_ptr.vmem [resolvable:$true] %s248
      %251 = dma.vmem_to_hbm [thread:$0]  %s249, 256, %s3, [#allocation4]
    $region21: #{tpu_custom_call.1} parent=1 // pred_fallthru
      _
    // Predicated region
    $region22: #{tpu_custom_call.1} parent=1 // pred_check
      _
    $region23: #{tpu_custom_call.1} parent=1 // pred_check_branch
      %253 = sbr.rel (0) target = $region25
    $region24: #{tpu_custom_call.1} parent=1 // pred_region
      %s255 = ssub.s32 256, 256
      %256 = vsyncadd [#allocation7], %s255
      %s258 = sshll.u32 [#allocation6], 4
      %s259 = int_to_ptr.vmem [resolvable:$true] %s258
      %261 = dma.vmem_to_hbm [thread:$0]  %s259, 256, %s4, [#allocation7]
    $region25: #{tpu_custom_call.1} parent=1 // pred_fallthru
      _
    // Predicated region
    $region26: #{tpu_custom_call.1} parent=1 // pred_check
      _
    $region27: #{tpu_custom_call.1} parent=1 // pred_check_branch
      %263 = sbr.rel (0) target = $region29
    $region28: #{tpu_custom_call.1} parent=1 // pred_region
      %264 = dma.done [#allocation4], 256
    $region29: #{tpu_custom_call.1} parent=1 // pred_fallthru
      _
    // Predicated region
    $region30: #{tpu_custom_call.1} parent=1 // pred_check
      _
    $region31: #{tpu_custom_call.1} parent=1 // pred_check_branch
      %266 = sbr.rel (0) target = $region33
    $region32: #{tpu_custom_call.1} parent=1 // pred_region
      %267 = dma.done [#allocation7], 256
    $region33: #{tpu_custom_call.1} parent=1 // pred_fallthru
      _
    %268 = vsyncpa [#allocation3], 1
    %269 = vsyncpa [#allocation4], 1
    %270 = vsyncpa [#allocation7], 1

</llo_original>
